<compile_context>
chip_gen: v7x
topology: tpu7x:2x2x1
jax: 0.10.0
libtpu: 0.0.40
codegen_flags: <defaults>
</compile_context>

<pallas_src>
import functools

import jax
import jax.numpy as jnp
from jax import lax
from jax.experimental import pallas as pl
from jax.experimental.pallas import tpu as pltpu

_MIB = 1024 * 1024


# ---------------------------------------------------------------------------
# Hardware-aware sizing
# ---------------------------------------------------------------------------
def _vmem_capacity_bytes() -> int:
    """Physical VMEM per TensorCore; conservative fallback if the query fails."""
    try:
        return int(pltpu.get_tpu_info().vmem_capacity_bytes)
    except Exception:
        return 64 * _MIB                      # v7x per-core size (most restrictive)


def _budgets():
    """(per-output-block byte budget, vmem_limit_bytes) for this generation."""
    cap = _vmem_capacity_bytes()
    if cap >= 100 * _MIB:                     # v5e / v6e: 128 MiB physical VMEM
        return 12 * _MIB, 64 * _MIB
    return 8 * _MIB, 44 * _MIB                # v7x: 64 MiB physical VMEM


def _round_rows(n: int, total: int) -> int:
    """Round a row (sublane) tile down to a multiple of 32 (uint8 native tile)
    or 8, and clamp to the full extent (full extent is always legal)."""
    if n >= 32:
        n = (n // 32) * 32
    elif n >= 8:
        n = (n // 8) * 8
    return max(1, min(n, total))


# ---------------------------------------------------------------------------
# Kernels
# ---------------------------------------------------------------------------
def _lane_tile(x, reps: int):
    """Tile x (..., L) `reps` times along the lane axis.

    Width-1 sources use a pure lane broadcast; wider sources use log2
    doublings (few large lane concats instead of `reps` narrow inserts)."""
    if reps == 1:
        return x
    base = x.shape[-1]
    if base == 1:
        return jnp.broadcast_to(x, x.shape[:-1] + (reps,))
    out = x
    done = 1
    while done * 2 <= reps:
        out = jnp.concatenate([out, out], axis=-1)
        done *= 2
    if done < reps:
        out = jnp.concatenate([out, out[..., :(reps - done) * base]], axis=-1)
    return out


def _xnor_merged_kernel(x_ref, w_ref, o_ref, *, depth, out_features, in_words):
    """Lane-merged XNOR (output lanes = depth * out_features * in_words).

    x_ref : (bt, depth * in_words)                  packed activations
    w_ref : (1,  depth * out_features * in_words)   packed weights (flattened)
    o_ref : (bt, depth * out_features * in_words)   lane-dense output block
    """
    w_inv = jnp.bitwise_not(w_ref[...])             # xnor(a,b) = a ^ ~b, hoisted
    x = x_ref[...]
    parts = []
    for d in range(depth):                          # static, small unroll
        xd = x[:, d * in_words:(d + 1) * in_words]            # (bt, in_words)
        parts.append(_lane_tile(xd, out_features))            # (bt, O*in_words)
    x_exp = parts[0] if depth == 1 else jnp.concatenate(parts, axis=-1)
    o_ref[...] = x_exp ^ w_inv                      # (1, N) broadcast over rows


def _xnor_4d_kernel(x_ref, w_ref, o_ref):
    """Plain broadcast XNOR for lane-dense packed width (I >= 128 bytes).

    x_ref : (bt, 1, 1, I)   w_ref : (1, ot, I)   o_ref : (bt, 1, ot, I)
    """
    w_inv = jnp.bitwise_not(w_ref[...])
    o_ref[...] = x_ref[...] ^ w_inv[None]


# ---------------------------------------------------------------------------
# Wrappers
# ---------------------------------------------------------------------------
def _forward_merged(x, w, block_budget, vmem_limit):
    B, D, I = x.shape
    _, O, _ = w.shape
    DOI = D * O * I

    # Repack consecutive bytes into the widest word dividing I so every lane op
    # runs on 32/16-bit lanes; bitwise XNOR is invariant under this view.
    if I % 4 == 0:
        word, wb = jnp.uint32, 4
    elif I % 2 == 0:
        word, wb = jnp.uint16, 2
    else:
        word, wb = jnp.uint8, 1

    def pack(a):
        if wb == 1:
            return a
        lead = a.shape[:-1]
        return lax.bitcast_convert_type(a.reshape(*lead, a.shape[-1] // wb, wb),
                                        word)

    x_m = pack(x.reshape(B, D * I))                 # (B, D*I/wb)
    w_m = pack(w.reshape(1, DOI))                   # (1, DOI/wb)
    iw = I // wb
    doi_w = DOI // wb

    bt = _round_rows(block_budget // DOI, B)        # full D*O*I per block
    grid = (pl.cdiv(B, bt),)

    kernel = functools.partial(_xnor_merged_kernel,
                               depth=D, out_features=O, in_words=iw)

    out_w = pl.pallas_call(
        kernel,
        out_shape=jax.ShapeDtypeStruct((B, doi_w), word),
        grid_spec=pl.GridSpec(
            grid=grid,
            in_specs=[
                pl.BlockSpec((bt, D * iw), lambda bi: (bi, 0)),
                # Constant block index -> weights DMA'd once and reused.
                pl.BlockSpec((1, doi_w), lambda bi: (0, 0)),
            ],
            out_specs=pl.BlockSpec((bt, doi_w), lambda bi: (bi, 0)),
        ),
        compiler_params=pltpu.CompilerParams(
            dimension_semantics=("parallel",),
            vmem_limit_bytes=vmem_limit,
        ),
        cost_estimate=pl.CostEstimate(
            flops=B * DOI,
            transcendentals=0,
            bytes_accessed=int(x.size + w.size + B * DOI),
        ),
    )(x_m, w_m)

    if wb == 1:
        return out_w.reshape(B, D, O, I)
    out_u8 = lax.bitcast_convert_type(out_w, jnp.uint8)     # (B, DOI/wb, wb)
    return out_u8.reshape(B, D, O, I)


def _forward_4d(x, w, block_budget, vmem_limit):
    B, D, I = x.shape
    _, O, _ = w.shape
    row = O * I                                     # bytes per (b, d) output row

    if row * 8 <= block_budget:
        # Preferred: full out_features per block -> one contiguous O*I-byte
        # writeback run per batch row, x fetched from HBM exactly once.
        ot = O
        bt = _round_rows(block_budget // row, B)
    else:
        # O*I alone exceeds the budget: split O in multiples of 32
        # (uint8 native sublane tile), keep 8 batch rows.
        bt = min(8, B)
        ot = min(O, max(32, (block_budget // (bt * I) // 32) * 32))

    grid = (pl.cdiv(B, bt), D, pl.cdiv(O, ot))      # batch tiles lead (megacore)
    x4 = x.reshape(B, D, 1, I)

    return pl.pallas_call(
        _xnor_4d_kernel,
        out_shape=jax.ShapeDtypeStruct((B, D, O, I), jnp.uint8),
        grid_spec=pl.GridSpec(
            grid=grid,
            in_specs=[
                # x tile depends on (batch-tile, depth) only -> reused across
                # the innermost O-tile axis without re-DMA.
                pl.BlockSpec((bt, 1, 1, I), lambda bi, d, oi: (bi, d, 0, 0)),
                pl.BlockSpec((1, ot, I), lambda bi, d, oi: (d, oi, 0)),
            ],
            out_specs=pl.BlockSpec((bt, 1, ot, I),
                                   lambda bi, d, oi: (bi, d, oi, 0)),
        ),
        compiler_params=pltpu.CompilerParams(
            dimension_semantics=("parallel", "parallel", "parallel"),
            vmem_limit_bytes=vmem_limit,
        ),
        cost_estimate=pl.CostEstimate(
            flops=B * D * O * I,
            transcendentals=0,
            bytes_accessed=int(x.size + w.size + B * D * O * I),
        ),
    )(x4, w)


def xnor_weight_forward(x, w):
    """XnorWeight._forward: x uint8 [B, D, I], w uint8 [D, O, I]
    -> uint8 [B, D, O, I] with out[b,d,o,i] = ~(x[b,d,i] ^ w[d,o,i])."""
    assert x.dtype == jnp.uint8 and w.dtype == jnp.uint8
    B, D, I = x.shape
    Dw, O, Iw = w.shape
    assert Dw == D and Iw == I

    block_budget, vmem_limit = _budgets()
    DOI = D * O * I

    # Lane-merged path whenever the packed width I is below a full lane tile:
    # it keeps the XOR and the output stores lane-dense.
    if I % 128 != 0 and DOI * 8 <= block_budget and D <= 64:
        return _forward_merged(x, w, block_budget, vmem_limit)

    # Lane-dense (or oversized-weights fallback) 4-D path.
    return _forward_4d(x, w, block_budget, vmem_limit)


if __name__ == "__main__":
    # Shapes consistent with the module: in_features=32 -> I = 4 packed bytes
    # (exercises the lane-merged path).
    batch, in_features, out_features, depth_features = 8, 32, 16, 2
    I = (in_features + 7) // 8

    key = jax.random.PRNGKey(0)
    kx, kw = jax.random.split(key)
    x = jax.random.randint(kx, (batch, depth_features, I), 0, 256,
                           dtype=jnp.int32).astype(jnp.uint8)
    w = jax.random.randint(kw, (depth_features, out_features, I), 0, 256,
                           dtype=jnp.int32).astype(jnp.uint8)

    out = xnor_weight_forward(x, w)
    jax.block_until_ready(out)

    ref = jnp.bitwise_not(jnp.bitwise_xor(x[:, :, None, :], w[None, :, :, :]))
    assert out.shape == (batch, depth_features, out_features, I)
    assert out.dtype == jnp.uint8
    assert jnp.array_equal(out, ref)

    # Also exercise the 4-D lane-dense fallback (in_features=1024 -> I = 128).
    I2 = 1024 // 8
    x2 = jax.random.randint(kx, (4, 1, I2), 0, 256,
                            dtype=jnp.int32).astype(jnp.uint8)
    w2 = jax.random.randint(kw, (1, 8, I2), 0, 256,
                            dtype=jnp.int32).astype(jnp.uint8)
    out2 = xnor_weight_forward(x2, w2)
    jax.block_until_ready(out2)
    ref2 = jnp.bitwise_not(jnp.bitwise_xor(x2[:, :, None, :], w2[None, :, :, :]))
    assert out2.shape == (4, 1, 8, I2)
    assert jnp.array_equal(out2, ref2)

    print("KERNEL_OK")
</pallas_src>

<mosaic_0001>
module attributes {stable_mosaic.version = 11 : i64} {
  func.func @_xnor_merged_kernel(%arg0: i32, %arg1: memref<8x2xi32, #tpu.memory_space<vmem>>, %arg2: memref<1x32xi32, #tpu.memory_space<vmem>>, %arg3: memref<8x32xi32, #tpu.memory_space<vmem>>) attributes {dimension_semantics = [#tpu.dimension_semantics<parallel>], iteration_bounds = array<i64: 1>, scalar_prefetch = 0 : i64, scratch_operands = 0 : i64, tpu.core_type = #tpu.core_type<tc>, window_params = [{transform_indices = @transform_0, window_bounds = array<i64: 8, 2>}, {pipeline_mode = #tpu.pipeline_mode<synchronous>, transform_indices = @transform_1, window_bounds = array<i64: 1, 32>}, {transform_indices = @transform_2, window_bounds = array<i64: 8, 32>}]} {
    %c0 = arith.constant 0 : index
    %c0_0 = arith.constant 0 : index
    %0 = vector.load %arg2[%c0, %c0_0] : memref<1x32xi32, #tpu.memory_space<vmem>>, vector<1x32xi32>
    %cst = arith.constant dense<-1> : vector<1x32xi32>
    %1 = arith.xori %0, %cst : vector<1x32xi32>
    %c0_1 = arith.constant 0 : index
    %c0_2 = arith.constant 0 : index
    %2 = vector.load %arg1[%c0_1, %c0_2] : memref<8x2xi32, #tpu.memory_space<vmem>>, vector<8x2xi32>
    %3 = vector.extract_strided_slice %2 {offsets = [0, 0], sizes = [8, 1], strides = [1, 1]} : vector<8x2xi32> to vector<8x1xi32>
    %4 = vector.shape_cast %3 : vector<8x1xi32> to vector<8x1xi32>
    %5 = vector.broadcast %4 : vector<8x1xi32> to vector<8x16xi32>
    %6 = vector.extract_strided_slice %2 {offsets = [0, 1], sizes = [8, 1], strides = [1, 1]} : vector<8x2xi32> to vector<8x1xi32>
    %7 = vector.shape_cast %6 : vector<8x1xi32> to vector<8x1xi32>
    %8 = vector.broadcast %7 : vector<8x1xi32> to vector<8x16xi32>
    %9 = tpu.concatenate %5, %8 in 1 : vector<8x16xi32>, vector<8x16xi32> -> vector<8x32xi32>
    %10 = vector.broadcast %1 : vector<1x32xi32> to vector<8x32xi32>
    %11 = arith.xori %9, %10 : vector<8x32xi32>
    %c0_3 = arith.constant 0 : index
    %c0_4 = arith.constant 0 : index
    %12 = vector.load %arg3[%c0_3, %c0_4] : memref<8x32xi32, #tpu.memory_space<vmem>>, vector<8x32xi32>
    tpu.vector_store %arg3[%c0_3, %c0_4], %11 {strides = array<i32>} : memref<8x32xi32, #tpu.memory_space<vmem>>, vector<8x32xi32>,
    return
  }
  func.func @transform_0(%arg0: i32) -> (i32, i32) {
    %c0_i32 = arith.constant 0 : i32
    %c0_i32_0 = arith.constant 0 : i32
    return %arg0, %c0_i32 : i32, i32
  }
  func.func @transform_1(%arg0: i32) -> (i32, i32) {
    %c0_i32 = arith.constant 0 : i32
    %c0_i32_0 = arith.constant 0 : i32
    %c0_i32_1 = arith.constant 0 : i32
    return %c0_i32, %c0_i32_0 : i32, i32
  }
  func.func @transform_2(%arg0: i32) -> (i32, i32) {
    %c0_i32 = arith.constant 0 : i32
    %c0_i32_0 = arith.constant 0 : i32
    return %arg0, %c0_i32 : i32, i32
  }
}

</mosaic_0001>

<llo_original>
// kernel: tpu_custom_call.1
$region0: #{tpu_custom_call.1}
  #allocation0 [shape = 'u32[]', space=smem, size = 0x4, offset = 0x4, fixed_abs, tag = 'smem constant byte address 0x4 - core index']
  #allocation1 [shape = 'u32[144,128]{1,0:T(1,128)}', space=vmem, size = 0x12000, scoped, tag = 'internal scratch']
  %s0 = inlined_call_operand.vmem [shape: u32[8,2], index: 0, kind: input, shape index: {}]
  %s1 = inlined_call_operand.vmem [shape: u32[1,32], index: 1, kind: input, shape index: {}]
  %s2 = inlined_call_operand.hbm [shape: u32[8,32], index: 2, kind: output, shape index: {}]
  %s3 = sld [smem:[#allocation0]]
  $region18: #{tpu_custom_call.1} parent=0
    _
  %s5 = ssub.s32 1, %s3
  %s6 = scalar_select 0, %s5, %s3
  $region1: #{tpu_custom_call.1} parent=0
    #allocation2 [shape = 'u8[4096]{0}', space=vmem, size = 0x1000, scoped, tag = 'output window, operand 0, single buffered']
    #allocation3 [shape = 's32[1]{0}', space=sflag, size = 0x4, scoped, tag = 'scoped memory for tpu_custom_call.1']
    %7 = vsyncpa [#allocation3], 0
    // Predicated region
    $region2: #{tpu_custom_call.1} parent=1 // pred_check
      _
    $region3: #{tpu_custom_call.1} parent=1 // pred_check_branch
      %9 = sbr.rel (0) target = $region5
    $region4: #{tpu_custom_call.1} parent=1 // pred_region
      _
    $region5: #{tpu_custom_call.1} parent=1 // pred_fallthru
      _
    // Predicated region
    $region6: #{tpu_custom_call.1} parent=1 // pred_check
      _
    $region7: #{tpu_custom_call.1} parent=1 // pred_check_branch
      %11 = sbr.rel (0) target = $region9
    $region8: #{tpu_custom_call.1} parent=1 // pred_region
      _
    $region9: #{tpu_custom_call.1} parent=1 // pred_fallthru
      _
    %v12 = vld [vmem:[%s1] sm:$0x1]
    %v13 = vxor.u32 %v12, 4294967295
    %v14 = vld [vmem:[%s0] sm:$0xff]
    %15 = vset.pattern.permute.xlu0 0
    %16 = vperm.xlu0 %15, %v14
    %v17 = vpop.permute.xlu0 %16
    %18 = vset.pattern.permute.xlu0 1
    %19 = vperm.xlu0 %18, %v14
    %v20 = vpop.permute.xlu0 %19
    %vm21 = vcmask 130048
    %v22 = vsel %vm21, %v17, %v20
    %v23 = vlaneseq
    %v24 = vshrl.u32 %v23, 7
    %v25 = vsub.s32 0, %v24
    %v26 = vrot.slane %v13, %v25
    %v27 = vxor.u32 %v22, %v26
    %vm28 = vcmask 261120
    %29 = vst.msk [vmem:[#allocation2] sm:$0xff] %vm28, %v27
    // Predicated region
    $region10: #{tpu_custom_call.1} parent=1 // pred_check
      _
    $region11: #{tpu_custom_call.1} parent=1 // pred_check_branch
      %31 = sbr.rel (0) target = $region13
    $region12: #{tpu_custom_call.1} parent=1 // pred_region
      %s33 = ssub.s32 128, 128
      %34 = vsyncadd [#allocation3], %s33
      %s36 = sshll.u32 [#allocation2], 4
      %s37 = int_to_ptr.vmem [resolvable:$true] %s36
      %39 = dma.vmem_to_hbm [thread:$0]  %s37, 128, %s2, [#allocation3]
    $region13: #{tpu_custom_call.1} parent=1 // pred_fallthru
      _
    // Predicated region
    $region14: #{tpu_custom_call.1} parent=1 // pred_check
      _
    $region15: #{tpu_custom_call.1} parent=1 // pred_check_branch
      %41 = sbr.rel (0) target = $region17
    $region16: #{tpu_custom_call.1} parent=1 // pred_region
      %42 = dma.done [#allocation3], 128
    $region17: #{tpu_custom_call.1} parent=1 // pred_fallthru
      _
    %43 = vsyncpa [#allocation3], 1

</llo_original>
